<compile_context>
chip_gen: v7x
topology: tpu7x:2x2x1
jax: 0.10.0
libtpu: 0.0.40
codegen_flags: <defaults>
</compile_context>

<pallas_src>
import jax
import jax.numpy as jnp
from jax.experimental import pallas as pl
from jax.experimental.pallas import tpu as pltpu

_HIDDEN_PAD = 128  # pad the 16-wide hidden layer to a full 128-lane vreg


def _round_up(n, m):
    return (n + m - 1) // m * m


def projector_kernel(x_ref, w1_ref, b1_ref, w2_ref, b2_ref, o_ref):
    """fc1 -> LeakyReLU(0.1) -> fc2 -> L2 row-normalize for one batch tile."""
    w1 = w1_ref[...]                       # [in_feat, 128]   (mxu dtype)
    w2 = w2_ref[...]                       # [128, low_dim]   (mxu dtype)

    # Cast x to the MXU dtype *inside* the kernel: no extra HBM pass over the
    # activations in the wrapper, and the DMA reads whatever dtype the caller
    # already has in HBM.
    x = x_ref[...].astype(w1.dtype)        # [TM, in_feat]

    # fc1 on the MXU with f32 accumulation, bias add in f32.
    h = jnp.dot(x, w1, preferred_element_type=jnp.float32) + b1_ref[...]
    # LeakyReLU(negative_slope=0.1) in f32 on the VPU.
    h = jnp.where(h > 0, h, 0.1 * h)

    # fc2 on the MXU with f32 accumulation, bias add in f32.
    y = jnp.dot(h.astype(w2.dtype), w2,
                preferred_element_type=jnp.float32) + b2_ref[...]

    # L2 normalize over the feature dim: rsqrt lowers to the EUP (its own
    # VLIW slot); eps clamp avoids NaN on an all-zero row (the PyTorch module
    # has no eps and would NaN there -- divergence only on degenerate inputs).
    ss = jnp.sum(y * y, axis=1, keepdims=True)
    inv = jax.lax.rsqrt(jnp.maximum(ss, 1e-12))
    o_ref[...] = (y * inv).astype(o_ref.dtype)


def projector_forward(x, w1, b1, w2, b2, *, block_b=4096,
                      mxu_dtype=jnp.bfloat16, out_dtype=jnp.float32):
    """Fused Projector forward.

    x:  [B, 2*low_dim] (f32 or bf16 -- passed to the kernel as-is)
    w1: [2*low_dim, 16] (pre-transposed nn.Linear weight),  b1: [16]
    w2: [16, low_dim],                                      b2: [low_dim]
    Returns [B, low_dim] out_dtype with unit-L2 rows.
    """
    B, in_feat = x.shape
    hidden = w1.shape[1]
    low_dim = w2.shape[1]

    # Zero-pad the hidden dim to 128 lanes (weights/biases only; KB-sized,
    # one-time).  Zero columns of w1/b1 give h=0 after LeakyReLU and zero rows
    # of w2 contribute 0, so results are unchanged.
    w1p = jnp.zeros((in_feat, _HIDDEN_PAD), jnp.float32).at[:, :hidden].set(
        w1.astype(jnp.float32))
    b1p = jnp.zeros((1, _HIDDEN_PAD), jnp.float32).at[:, :hidden].set(
        jnp.reshape(b1, (1, hidden)).astype(jnp.float32))
    w2p = jnp.zeros((_HIDDEN_PAD, low_dim), jnp.float32).at[:hidden, :].set(
        w2.astype(jnp.float32))
    b2p = jnp.reshape(b2, (1, low_dim)).astype(jnp.float32)

    # Only the (tiny) weights are pre-cast to the MXU dtype; biases stay f32
    # and the accumulation / elementwise path stays f32 inside the kernel.
    w1p = w1p.astype(mxu_dtype)
    w2p = w2p.astype(mxu_dtype)

    # Batch tiling:
    #   * large tiles (up to block_b rows) to amortize per-grid-step overhead;
    #     at tm=4096 the double-buffered x/out tiles + intermediates are only
    #     a few MiB -- well under the scoped-VMEM default on every generation.
    #   * cap at ceil(B/2) (8-aligned) so the grid has >=2 steps when B allows,
    #     keeping both v7x TensorCores busy under dimension_semantics=parallel.
    #   * the ragged last tile (B % tm != 0) is handled by Pallas directly --
    #     no jnp.pad copy of x and no output slicing.
    tm = min(block_b, _round_up(-(-B // 2), 8))
    grid = (pl.cdiv(B, tm),)

    out = pl.pallas_call(
        projector_kernel,
        out_shape=jax.ShapeDtypeStruct((B, low_dim), out_dtype),
        grid=grid,
        in_specs=[
            pl.BlockSpec((tm, in_feat), lambda i: (i, 0)),           # x tile
            pl.BlockSpec((in_feat, _HIDDEN_PAD), lambda i: (0, 0)),  # w1 (resident)
            pl.BlockSpec((1, _HIDDEN_PAD), lambda i: (0, 0)),        # b1 (resident)
            pl.BlockSpec((_HIDDEN_PAD, low_dim), lambda i: (0, 0)),  # w2 (resident)
            pl.BlockSpec((1, low_dim), lambda i: (0, 0)),            # b2 (resident)
        ],
        out_specs=pl.BlockSpec((tm, low_dim), lambda i: (i, 0)),
        compiler_params=pltpu.CompilerParams(
            dimension_semantics=("parallel",)),
    )(x, w1p, b1p, w2p, b2p)

    return out


def init_params(key, low_dim):
    """Deterministic synthetic init matching nn.Linear shapes.

    PyTorch stores Linear weights as [out, in]; we keep them pre-transposed
    to [in, out] for the kernel.
    """
    k1, k2, k3, k4 = jax.random.split(key, 4)
    in1, out1 = low_dim * 2, 16
    in2, out2 = 16, low_dim
    lim1 = 1.0 / (in1 ** 0.5)
    lim2 = 1.0 / (in2 ** 0.5)
    w1 = jax.random.uniform(k1, (in1, out1), jnp.float32, -lim1, lim1)
    b1 = jax.random.uniform(k2, (out1,), jnp.float32, -lim1, lim1)
    w2 = jax.random.uniform(k3, (in2, out2), jnp.float32, -lim2, lim2)
    b2 = jax.random.uniform(k4, (out2,), jnp.float32, -lim2, lim2)
    return w1, b1, w2, b2


def reference_forward(x, w1, b1, w2, b2):
    h = x @ w1 + b1
    h = jnp.where(h > 0, h, 0.1 * h)
    y = h @ w2 + b2
    norm = jnp.sqrt(jnp.sum(y * y, axis=1, keepdims=True))
    return y / norm


if __name__ == "__main__":
    low_dim = 32
    key = jax.random.PRNGKey(0)
    kx, kp = jax.random.split(key)
    w1, b1, w2, b2 = init_params(kp, low_dim)

    # batch=8 hits the exact-tile path; batch=10 exercises the ragged last
    # tile (grid of 2 steps, no jnp.pad / no output slicing).
    for batch in (8, 10):
        x = jax.random.normal(kx, (batch, low_dim * 2), jnp.float32)
        ref = reference_forward(x, w1, b1, w2, b2)

        # f32 MXU path: tight check against the pure-JAX reference.
        out = jax.block_until_ready(
            projector_forward(x, w1, b1, w2, b2, mxu_dtype=jnp.float32))
        assert out.shape == (batch, low_dim)
        assert jnp.allclose(out, ref, atol=1e-5, rtol=1e-5)
        assert jnp.allclose(jnp.linalg.norm(out, axis=1), 1.0, atol=1e-5)

        # Default bf16 MXU path (recommended on v5e; fine everywhere): loose
        # check, rows still unit-norm.
        out_bf16 = jax.block_until_ready(
            projector_forward(x, w1, b1, w2, b2))
        assert out_bf16.shape == (batch, low_dim)
        assert jnp.allclose(out_bf16, ref, atol=2e-2)
        assert jnp.allclose(jnp.linalg.norm(out_bf16, axis=1), 1.0, atol=1e-3)

    print("KERNEL_OK")
</pallas_src>

<mosaic_0001>
module attributes {stable_mosaic.version = 11 : i64} {
  func.func @projector_kernel(%arg0: i32, %arg1: memref<8x64xf32, #tpu.memory_space<vmem>>, %arg2: memref<64x128xf32, #tpu.memory_space<vmem>>, %arg3: memref<1x128xf32, #tpu.memory_space<vmem>>, %arg4: memref<128x32xf32, #tpu.memory_space<vmem>>, %arg5: memref<1x32xf32, #tpu.memory_space<vmem>>, %arg6: memref<8x32xf32, #tpu.memory_space<vmem>>) attributes {dimension_semantics = [#tpu.dimension_semantics<parallel>], iteration_bounds = array<i64: 1>, scalar_prefetch = 0 : i64, scratch_operands = 0 : i64, tpu.core_type = #tpu.core_type<tc>, window_params = [{transform_indices = @transform_0, window_bounds = array<i64: 8, 64>}, {pipeline_mode = #tpu.pipeline_mode<synchronous>, transform_indices = @transform_1, window_bounds = array<i64: 64, 128>}, {pipeline_mode = #tpu.pipeline_mode<synchronous>, transform_indices = @transform_2, window_bounds = array<i64: 1, 128>}, {pipeline_mode = #tpu.pipeline_mode<synchronous>, transform_indices = @transform_3, window_bounds = array<i64: 128, 32>}, {pipeline_mode = #tpu.pipeline_mode<synchronous>, transform_indices = @transform_4, window_bounds = array<i64: 1, 32>}, {transform_indices = @transform_5, window_bounds = array<i64: 8, 32>}]} {
    %c0 = arith.constant 0 : index
    %c0_0 = arith.constant 0 : index
    %0 = vector.load %arg2[%c0, %c0_0] : memref<64x128xf32, #tpu.memory_space<vmem>>, vector<64x128xf32>
    %c0_1 = arith.constant 0 : index
    %c0_2 = arith.constant 0 : index
    %1 = vector.load %arg4[%c0_1, %c0_2] : memref<128x32xf32, #tpu.memory_space<vmem>>, vector<128x32xf32>
    %c0_3 = arith.constant 0 : index
    %c0_4 = arith.constant 0 : index
    %2 = vector.load %arg1[%c0_3, %c0_4] : memref<8x64xf32, #tpu.memory_space<vmem>>, vector<8x64xf32>
    %cst = arith.constant dense<0.000000e+00> : vector<8x128xf32>
    %3 = tpu.matmul %2, %0, %cst {dimension_numbers = #tpu.dot_dimension_numbers<[1], [0], [0], [1], [0, 0, 1, 1], [], []>} : vector<8x64xf32>, vector<64x128xf32>, vector<8x128xf32> -> vector<8x128xf32>
    %c0_5 = arith.constant 0 : index
    %c0_6 = arith.constant 0 : index
    %4 = vector.load %arg3[%c0_5, %c0_6] : memref<1x128xf32, #tpu.memory_space<vmem>>, vector<1x128xf32>
    %5 = vector.broadcast %4 : vector<1x128xf32> to vector<8x128xf32>
    %6 = arith.addf %3, %5 : vector<8x128xf32>
    %cst_7 = arith.constant 0.000000e+00 : f32
    %7 = vector.broadcast %cst_7 : f32 to vector<8x128xf32>
    %8 = arith.cmpf ogt, %6, %7 : vector<8x128xf32>
    %cst_8 = arith.constant 1.000000e-01 : f32
    %9 = vector.broadcast %cst_8 : f32 to vector<8x128xf32>
    %10 = arith.mulf %9, %6 : vector<8x128xf32>
    %11 = arith.select %8, %6, %10 : vector<8x128xi1>, vector<8x128xf32>
    %cst_9 = arith.constant dense<0.000000e+00> : vector<8x32xf32>
    %12 = tpu.matmul %11, %1, %cst_9 {dimension_numbers = #tpu.dot_dimension_numbers<[1], [0], [0], [1], [0, 0, 1, 1], [], []>} : vector<8x128xf32>, vector<128x32xf32>, vector<8x32xf32> -> vector<8x32xf32>
    %c0_10 = arith.constant 0 : index
    %c0_11 = arith.constant 0 : index
    %13 = vector.load %arg5[%c0_10, %c0_11] : memref<1x32xf32, #tpu.memory_space<vmem>>, vector<1x32xf32>
    %14 = vector.broadcast %13 : vector<1x32xf32> to vector<8x32xf32>
    %15 = arith.addf %12, %14 : vector<8x32xf32>
    %16 = arith.mulf %15, %15 : vector<8x32xf32>
    %cst_12 = arith.constant dense<0.000000e+00> : vector<8xf32>
    %17 = vector.multi_reduction <add>, %16, %cst_12 [1] : vector<8x32xf32> to vector<8xf32>
    %18 = vector.shape_cast %17 : vector<8xf32> to vector<8x1xf32>
    %cst_13 = arith.constant 9.99999996E-13 : f32
    %19 = vector.broadcast %cst_13 : f32 to vector<8x1xf32>
    %20 = arith.maximumf %18, %19 : vector<8x1xf32>
    %21 = math.rsqrt %20 : vector<8x1xf32>
    %22 = vector.broadcast %21 : vector<8x1xf32> to vector<8x32xf32>
    %23 = arith.mulf %15, %22 : vector<8x32xf32>
    %c0_14 = arith.constant 0 : index
    %c0_15 = arith.constant 0 : index
    %24 = vector.load %arg6[%c0_14, %c0_15] : memref<8x32xf32, #tpu.memory_space<vmem>>, vector<8x32xf32>
    tpu.vector_store %arg6[%c0_14, %c0_15], %23 {strides = array<i32>} : memref<8x32xf32, #tpu.memory_space<vmem>>, vector<8x32xf32>,
    return
  }
  func.func @transform_0(%arg0: i32) -> (i32, i32) {
    %c0_i32 = arith.constant 0 : i32
    %c0_i32_0 = arith.constant 0 : i32
    return %arg0, %c0_i32 : i32, i32
  }
  func.func @transform_1(%arg0: i32) -> (i32, i32) {
    %c0_i32 = arith.constant 0 : i32
    %c0_i32_0 = arith.constant 0 : i32
    %c0_i32_1 = arith.constant 0 : i32
    return %c0_i32, %c0_i32_0 : i32, i32
  }
  func.func @transform_2(%arg0: i32) -> (i32, i32) {
    %c0_i32 = arith.constant 0 : i32
    %c0_i32_0 = arith.constant 0 : i32
    %c0_i32_1 = arith.constant 0 : i32
    return %c0_i32, %c0_i32_0 : i32, i32
  }
  func.func @transform_3(%arg0: i32) -> (i32, i32) {
    %c0_i32 = arith.constant 0 : i32
    %c0_i32_0 = arith.constant 0 : i32
    %c0_i32_1 = arith.constant 0 : i32
    return %c0_i32, %c0_i32_0 : i32, i32
  }
  func.func @transform_4(%arg0: i32) -> (i32, i32) {
    %c0_i32 = arith.constant 0 : i32
    %c0_i32_0 = arith.constant 0 : i32
    %c0_i32_1 = arith.constant 0 : i32
    return %c0_i32, %c0_i32_0 : i32, i32
  }
  func.func @transform_5(%arg0: i32) -> (i32, i32) {
    %c0_i32 = arith.constant 0 : i32
    %c0_i32_0 = arith.constant 0 : i32
    return %arg0, %c0_i32 : i32, i32
  }
}

</mosaic_0001>

<llo_original>
// kernel: tpu_custom_call.1
$region0: #{tpu_custom_call.1}
  #allocation0 [shape = 'u32[]', space=smem, size = 0x4, offset = 0x4, fixed_abs, tag = 'smem constant byte address 0x4 - core index']
  #allocation1 [shape = 'u32[144,128]{1,0:T(1,128)}', space=vmem, size = 0x12000, scoped, tag = 'internal scratch']
  %s0 = inlined_call_operand.vmem [shape: f32[8,64], index: 0, kind: input, shape index: {}]
  %s1 = inlined_call_operand.vmem [shape: f32[64,128], index: 1, kind: input, shape index: {}]
  %s2 = inlined_call_operand.vmem [shape: f32[1,128], index: 2, kind: input, shape index: {}]
  %s3 = inlined_call_operand.vmem [shape: f32[128,32], index: 3, kind: input, shape index: {}]
  %s4 = inlined_call_operand.vmem [shape: f32[1,32], index: 4, kind: input, shape index: {}]
  %s5 = inlined_call_operand.hbm [shape: f32[8,32], index: 5, kind: output, shape index: {}]
  %s6 = sld [smem:[#allocation0]]
  $region30: #{tpu_custom_call.1} parent=0
    _
  %s8 = ssub.s32 1, %s6
  %s9 = scalar_select 0, %s8, %s6
  $region1: #{tpu_custom_call.1} parent=0
    #allocation2 [shape = 'u8[4096]{0}', space=vmem, size = 0x1000, scoped, tag = 'output window, operand 0, single buffered']
    #allocation3 [shape = 's32[1]{0}', space=sflag, size = 0x4, scoped, tag = 'scoped memory for tpu_custom_call.1']
    %10 = vsyncpa [#allocation3], 0
    // Predicated region
    $region2: #{tpu_custom_call.1} parent=1 // pred_check
      _
    $region3: #{tpu_custom_call.1} parent=1 // pred_check_branch
      %12 = sbr.rel (0) target = $region5
    $region4: #{tpu_custom_call.1} parent=1 // pred_region
      _
    $region5: #{tpu_custom_call.1} parent=1 // pred_fallthru
      _
    // Predicated region
    $region6: #{tpu_custom_call.1} parent=1 // pred_check
      _
    $region7: #{tpu_custom_call.1} parent=1 // pred_check_branch
      %14 = sbr.rel (0) target = $region9
    $region8: #{tpu_custom_call.1} parent=1 // pred_region
      _
    $region9: #{tpu_custom_call.1} parent=1 // pred_fallthru
      _
    // Predicated region
    $region10: #{tpu_custom_call.1} parent=1 // pred_check
      _
    $region11: #{tpu_custom_call.1} parent=1 // pred_check_branch
      %16 = sbr.rel (0) target = $region13
    $region12: #{tpu_custom_call.1} parent=1 // pred_region
      _
    $region13: #{tpu_custom_call.1} parent=1 // pred_fallthru
      _
    // Predicated region
    $region14: #{tpu_custom_call.1} parent=1 // pred_check
      _
    $region15: #{tpu_custom_call.1} parent=1 // pred_check_branch
      %18 = sbr.rel (0) target = $region17
    $region16: #{tpu_custom_call.1} parent=1 // pred_region
      _
    $region17: #{tpu_custom_call.1} parent=1 // pred_fallthru
      _
    // Predicated region
    $region18: #{tpu_custom_call.1} parent=1 // pred_check
      _
    $region19: #{tpu_custom_call.1} parent=1 // pred_check_branch
      %20 = sbr.rel (0) target = $region21
    $region20: #{tpu_custom_call.1} parent=1 // pred_region
      _
    $region21: #{tpu_custom_call.1} parent=1 // pred_fallthru
      _
    %v21 = vld [vmem:[%s1] sm:$0xff]
    %v22 = vld [vmem:[%s1 + $0x8] sm:$0xff]
    %v23 = vld [vmem:[%s1 + $0x10] sm:$0xff]
    %v24 = vld [vmem:[%s1 + $0x18] sm:$0xff]
    %v25 = vld [vmem:[%s1 + $0x20] sm:$0xff]
    %v26 = vld [vmem:[%s1 + $0x28] sm:$0xff]
    %v27 = vld [vmem:[%s1 + $0x30] sm:$0xff]
    %v28 = vld [vmem:[%s1 + $0x38] sm:$0xff]
    %v29 = vld [vmem:[%s3] sm:$0xff]
    %v30 = vld [vmem:[%s3 + $0x8] sm:$0xff]
    %v31 = vld [vmem:[%s3 + $0x10] sm:$0xff]
    %v32 = vld [vmem:[%s3 + $0x18] sm:$0xff]
    %v33 = vld [vmem:[%s3 + $0x20] sm:$0xff]
    %v34 = vld [vmem:[%s3 + $0x28] sm:$0xff]
    %v35 = vld [vmem:[%s3 + $0x30] sm:$0xff]
    %v36 = vld [vmem:[%s3 + $0x38] sm:$0xff]
    %v37 = vld [vmem:[%s3 + $0x40] sm:$0xff]
    %v38 = vld [vmem:[%s3 + $0x48] sm:$0xff]
    %v39 = vld [vmem:[%s3 + $0x50] sm:$0xff]
    %v40 = vld [vmem:[%s3 + $0x58] sm:$0xff]
    %v41 = vld [vmem:[%s3 + $0x60] sm:$0xff]
    %v42 = vld [vmem:[%s3 + $0x68] sm:$0xff]
    %v43 = vld [vmem:[%s3 + $0x70] sm:$0xff]
    %v44 = vld [vmem:[%s3 + $0x78] sm:$0xff]
    %v45 = vld [vmem:[%s0] sm:$0xff]
    %v46 = vld [vmem:[%s2] sm:$0x1]
    %v48 = vlaneseq
    %v49 = vshrl.u32 %v48, 7
    %v50 = vsub.s32 0, %v49
    %v51 = vrot.slane %v46, %v50
    %vm53 = vcmask 523264
    %v55 = vsel %vm53, %v45, 0
    %57 = vmatprep.subr.mxu0 0.0
    %58 = vmatpush1.msra.mxu0 %v21
    %59 = vmatprep.subr.mxu0 0.0
    %60 = vmatpush1.msra.mxu0 %v22
    %61 = vmatprep.subr.mxu0 0.0
    %62 = vmatpush1.msra.mxu0 %v23
    %63 = vmatprep.subr.mxu0 0.0
    %64 = vmatpush1.msra.mxu0 %v24
    %65 = vmatprep.subr.mxu0 0.0
    %66 = vmatpush1.msra.mxu0 %v25
    %67 = vmatprep.subr.mxu0 0.0
    %68 = vmatpush1.msra.mxu0 %v26
    %69 = vmatprep.subr.mxu0 0.0
    %70 = vmatpush1.msra.mxu0 %v27
    %71 = vmatprep.subr.mxu0 0.0
    %72 = vmatpush1.msra.mxu0 %v28
    %73 = vmatprep.subr.mxu0 0.0
    %74 = vmatpush1.msra.mxu0 0.0
    %75 = vmatprep.subr.mxu0 0.0
    %76 = vmatpush1.msra.mxu0 0.0
    %77 = vmatprep.subr.mxu0 0.0
    %78 = vmatpush1.msra.mxu0 0.0
    %79 = vmatprep.subr.mxu0 0.0
    %80 = vmatpush1.msra.mxu0 0.0
    %81 = vmatprep.subr.mxu0 0.0
    %82 = vmatpush1.msra.mxu0 0.0
    %83 = vmatprep.subr.mxu0 0.0
    %84 = vmatpush1.msra.mxu0 0.0
    %85 = vmatprep.subr.mxu0 0.0
    %86 = vmatpush1.msra.mxu0 0.0
    %87 = vmatprep.subr.mxu0 0.0
    %88 = vmatpush1.msra.mxu0 0.0
    %89 = vmatprep.subr.mxu0 0.0
    %90 = vmatpush1.msra.mxu0 0.0
    %91 = vmatprep.subr.mxu0 0.0
    %92 = vmatpush1.msra.mxu0 0.0
    %93 = vmatprep.subr.mxu0 0.0
    %94 = vmatpush1.msra.mxu0 0.0
    %95 = vmatprep.subr.mxu0 0.0
    %96 = vmatpush1.msra.mxu0 0.0
    %97 = vmatprep.subr.mxu0 0.0
    %98 = vmatpush1.msra.mxu0 0.0
    %99 = vmatprep.subr.mxu0 0.0
    %100 = vmatpush1.msra.mxu0 0.0
    %101 = vmatprep.subr.mxu0 0.0
    %102 = vmatpush1.msra.mxu0 0.0
    %103 = vmatprep.subr.mxu0 0.0
    %104 = vmatpush1.msra.mxu0 0.0
    %105 = vmatprep.subr.mxu0 0.0
    %106 = vmatpush1.msra.mxu0 0.0
    %107 = vmatprep.subr.mxu0 0.0
    %108 = vmatpush1.msra.mxu0 0.0
    %109 = vmatprep.subr.mxu0 0.0
    %110 = vmatpush1.msra.mxu0 0.0
    %111 = vmatprep.subr.mxu0 0.0
    %112 = vmatpush1.msra.mxu0 0.0
    %113 = vmatprep.subr.mxu0 0.0
    %114 = vmatpush1.msra.mxu0 0.0
    %115 = vmatprep.subr.mxu0 0.0
    %116 = vmatpush1.msra.mxu0 0.0
    %117 = vmatprep.subr.mxu0 0.0
    %118 = vmatpush1.msra.mxu0 0.0
    %119 = vmatprep.subr.mxu0 0.0
    %120 = vmatpush1.msra.mxu0 0.0
    %121 = vmatprep.mubr.f32.mxu0 0.0
    %122 = vmatmul.mubr.f32.gmra.mrb[0].mxu0 %v55
    %v123 = vpop.f32.mrb[0].mxu0
    %v124 = vadd.f32 %v51, %v123
    %v125 = vpop.f32.mrb[0].mxu0
    %126 = vdwg.mxu0
    %vm127 = vcmp.gt.f32.partialorder %v124, 0.0
    %v128 = vmul.f32 %v124, 0.1
    %v129 = vsel %vm127, %v124, %v128
    %v130 = vld [vmem:[%s4] sm:$0x1]
    %v132 = vlaneseq
    %v133 = vshrl.u32 %v132, 7
    %v134 = vsub.s32 0, %v133
    %v135 = vrot.slane %v130, %v134
    %137 = vmatprep.subr.mxu0 0.0
    %138 = vmatpush1.msra.mxu0 %v29
    %139 = vmatprep.subr.mxu0 0.0
    %140 = vmatpush1.msra.mxu0 %v30
    %141 = vmatprep.subr.mxu0 0.0
    %142 = vmatpush1.msra.mxu0 %v31
    %143 = vmatprep.subr.mxu0 0.0
    %144 = vmatpush1.msra.mxu0 %v32
    %145 = vmatprep.subr.mxu0 0.0
    %146 = vmatpush1.msra.mxu0 %v33
    %147 = vmatprep.subr.mxu0 0.0
    %148 = vmatpush1.msra.mxu0 %v34
    %149 = vmatprep.subr.mxu0 0.0
    %150 = vmatpush1.msra.mxu0 %v35
    %151 = vmatprep.subr.mxu0 0.0
    %152 = vmatpush1.msra.mxu0 %v36
    %153 = vmatprep.subr.mxu0 0.0
    %154 = vmatpush1.msra.mxu0 %v37
    %155 = vmatprep.subr.mxu0 0.0
    %156 = vmatpush1.msra.mxu0 %v38
    %157 = vmatprep.subr.mxu0 0.0
    %158 = vmatpush1.msra.mxu0 %v39
    %159 = vmatprep.subr.mxu0 0.0
    %160 = vmatpush1.msra.mxu0 %v40
    %161 = vmatprep.subr.mxu0 0.0
    %162 = vmatpush1.msra.mxu0 %v41
    %163 = vmatprep.subr.mxu0 0.0
    %164 = vmatpush1.msra.mxu0 %v42
    %165 = vmatprep.subr.mxu0 0.0
    %166 = vmatpush1.msra.mxu0 %v43
    %167 = vmatprep.subr.mxu0 0.0
    %168 = vmatpush1.msra.mxu0 %v44
    %169 = vmatprep.subr.mxu0 0.0
    %170 = vmatpush1.msra.mxu0 0.0
    %171 = vmatprep.subr.mxu0 0.0
    %172 = vmatpush1.msra.mxu0 0.0
    %173 = vmatprep.subr.mxu0 0.0
    %174 = vmatpush1.msra.mxu0 0.0
    %175 = vmatprep.subr.mxu0 0.0
    %176 = vmatpush1.msra.mxu0 0.0
    %177 = vmatprep.subr.mxu0 0.0
    %178 = vmatpush1.msra.mxu0 0.0
    %179 = vmatprep.subr.mxu0 0.0
    %180 = vmatpush1.msra.mxu0 0.0
    %181 = vmatprep.subr.mxu0 0.0
    %182 = vmatpush1.msra.mxu0 0.0
    %183 = vmatprep.subr.mxu0 0.0
    %184 = vmatpush1.msra.mxu0 0.0
    %185 = vmatprep.subr.mxu0 0.0
    %186 = vmatpush1.msra.mxu0 0.0
    %187 = vmatprep.subr.mxu0 0.0
    %188 = vmatpush1.msra.mxu0 0.0
    %189 = vmatprep.subr.mxu0 0.0
    %190 = vmatpush1.msra.mxu0 0.0
    %191 = vmatprep.subr.mxu0 0.0
    %192 = vmatpush1.msra.mxu0 0.0
    %193 = vmatprep.subr.mxu0 0.0
    %194 = vmatpush1.msra.mxu0 0.0
    %195 = vmatprep.subr.mxu0 0.0
    %196 = vmatpush1.msra.mxu0 0.0
    %197 = vmatprep.subr.mxu0 0.0
    %198 = vmatpush1.msra.mxu0 0.0
    %199 = vmatprep.subr.mxu0 0.0
    %200 = vmatpush1.msra.mxu0 0.0
    %201 = vmatprep.mubr.f32.mxu0 0.0
    %202 = vmatmul.mubr.f32.gmra.mrb[0].mxu0 %v129
    %v203 = vpop.f32.mrb[0].mxu0
    %v204 = vadd.f32 %v135, %v203
    %v205 = vpop.f32.mrb[0].mxu0
    %206 = vdwg.mxu0
    %v207 = vmul.f32 %v204, %v204
    %vm208 = vcmask 261120
    %v209 = vsel %vm208, %v207, 0.0
    %210 = vadd.xlane.f32.xlu0 %v209
    %v211 = vpop.xlane.xlu0 %210
    %v212 = vmax.f32 %v211, 1e-12
    %v213 = vrsqrt.pop %v212
    %v214 = vmul.f32 %v204, %v213
    %215 = vst.msk [vmem:[#allocation2] sm:$0xff] %vm208, %v214
    // Predicated region
    $region22: #{tpu_custom_call.1} parent=1 // pred_check
      _
    $region23: #{tpu_custom_call.1} parent=1 // pred_check_branch
      %217 = sbr.rel (0) target = $region25
    $region24: #{tpu_custom_call.1} parent=1 // pred_region
      %s219 = ssub.s32 128, 128
      %220 = vsyncadd [#allocation3], %s219
      %s222 = sshll.u32 [#allocation2], 4
      %s223 = int_to_ptr.vmem [resolvable:$true] %s222
      %225 = dma.vmem_to_hbm [thread:$0]  %s223, 128, %s5, [#allocation3]
    $region25: #{tpu_custom_call.1} parent=1 // pred_fallthru
      _
    // Predicated region
    $region26: #{tpu_custom_call.1} parent=1 // pred_check
      _
    $region27: #{tpu_custom_call.1} parent=1 // pred_check_branch
      %227 = sbr.rel (0) target = $region29
    $region28: #{tpu_custom_call.1} parent=1 // pred_region
      %228 = dma.done [#allocation3], 128
    $region29: #{tpu_custom_call.1} parent=1 // pred_fallthru
      _
    %229 = vsyncpa [#allocation3], 1

</llo_original>
